<compile_context>
chip_gen: v6e
topology: v6e:2x2x1
jax: 0.10.0
libtpu: 0.0.40
codegen_flags: <defaults>
</compile_context>

<pallas_src>
import functools

import jax
import jax.numpy as jnp
from jax import lax
from jax.experimental import pallas as pl
from jax.experimental.pallas import tpu as pltpu


def _mask_cid_kernel(x_ref, *rest, has_target):
    """Fused scores + first-occurrence argmax + one-hot gather.

    x_ref      : (TB, C, D) native-dtype capsule activations
    t_ref      : (TB, C)    optional target scores (one-hot labels)
    masked_ref : (TB, D)    selected capsule per batch row (x's dtype)
    idx_ref    : (TB, 1)    i32 argmax class index per batch row
    """
    if has_target:
        t_ref, masked_ref, idx_ref = rest
    else:
        masked_ref, idx_ref = rest

    x = x_ref[...]                                        # (TB, C, D), native dtype
    TB, C, _ = x.shape

    if has_target:
        scores = t_ref[...].astype(jnp.float32)           # (TB, C)
    else:
        # squared L2 norm over the capsule dim, accumulated in f32
        # (argmax-equivalent to torch.norm; saves the sqrt / EUP op)
        xf = x.astype(jnp.float32)
        scores = jnp.sum(xf * xf, axis=2)                 # (TB, C)

    # first-occurrence argmax along the class axis (matches torch tie-break)
    max_val = jnp.max(scores, axis=1, keepdims=True)      # (TB, 1)
    c_iota = lax.broadcasted_iota(jnp.int32, (TB, C), 1)  # (TB, C)
    cand = jnp.where(scores == max_val, c_iota, C)        # non-max -> sentinel C
    idx = jnp.min(cand, axis=1, keepdims=True)            # (TB, 1) int32

    # data-dependent row select as a one-hot masked reduce (VPU/XLU only)
    onehot = (c_iota == idx).astype(x.dtype)              # (TB, C) exact 0/1
    masked = jnp.sum(x * onehot[:, :, None], axis=1)      # (TB, D)

    masked_ref[...] = masked.astype(masked_ref.dtype)
    idx_ref[...] = idx.astype(jnp.int32)


def mask_cid(x, target=None, *, batch_tile=512):
    """JAX/Pallas equivalent of Mask_CID.forward(x, target).

    x      : (B, C, D) or (B, C, D, 1) array (capsule outputs), any float dtype
    target : optional (B, C) array (e.g. one-hot labels)
    returns (masked, idx): masked of shape (B, 1, D) (trailing 1 squeezed like the
    reference), dtype of x; idx of shape (B,), int32.
    """
    orig_shape = x.shape
    B, C = int(orig_shape[0]), int(orig_shape[1])
    D = 1
    for s in orig_shape[2:]:
        D *= int(s)
    # No dtype cast here: native dtype goes straight through the kernel DMA.
    x3 = x.reshape(B, C, D)

    has_target = target is not None
    kernel = functools.partial(_mask_cid_kernel, has_target=has_target)

    out_shape = (
        jax.ShapeDtypeStruct((B, D), x3.dtype),
        jax.ShapeDtypeStruct((B, 1), jnp.int32),
    )

    inputs = [x3]
    if has_target:
        inputs.append(target.reshape(B, C))

    if B <= batch_tile:
        # Small batch: everything fits VMEM trivially -> ungridded call, no
        # pipeline scaffolding, whole arrays resident in VMEM.
        vmem = pltpu.MemorySpace.VMEM
        in_specs = [pl.BlockSpec(memory_space=vmem) for _ in inputs]
        out_specs = (
            pl.BlockSpec(memory_space=vmem),
            pl.BlockSpec(memory_space=vmem),
        )
        masked2d, idx2d = pl.pallas_call(
            kernel,
            out_shape=out_shape,
            in_specs=in_specs,
            out_specs=out_specs,
        )(*inputs)
    else:
        # Large batch: tile over B (TB a multiple of 8, sized well under v7x's
        # 32 MiB default scoped VMEM) and let megacore shard the batch axis.
        TB = batch_tile
        grid = (pl.cdiv(B, TB),)
        in_specs = [pl.BlockSpec((TB, C, D), lambda i: (i, 0, 0))]
        if has_target:
            in_specs.append(pl.BlockSpec((TB, C), lambda i: (i, 0)))
        out_specs = (
            pl.BlockSpec((TB, D), lambda i: (i, 0)),
            pl.BlockSpec((TB, 1), lambda i: (i, 0)),
        )
        masked2d, idx2d = pl.pallas_call(
            kernel,
            out_shape=out_shape,
            grid=grid,
            in_specs=in_specs,
            out_specs=out_specs,
            compiler_params=pltpu.CompilerParams(
                dimension_semantics=("parallel",)),
        )(*inputs)

    # masked = zeros((B, 1) + x.shape[2:]) filled per-row, then .squeeze(-1)
    masked_shape = (B, 1) + tuple(orig_shape[2:])
    masked = masked2d.reshape(masked_shape)
    if masked_shape[-1] == 1:
        masked = masked.reshape(masked_shape[:-1])
    idx = idx2d.reshape(B)
    return masked, idx


if __name__ == "__main__":
    key = jax.random.PRNGKey(0)
    kx, kb = jax.random.split(key)

    # capsule-net style shapes: batch=4, num_capsules=10, capsule_dim=16, trailing 1
    B, C, D = 4, 10, 16
    x = jax.random.normal(kx, (B, C, D, 1), jnp.float32)
    x3 = x[..., 0]                                          # (B, C, D)

    # --- inference path (target=None), ungridded ---
    masked, idx = mask_cid(x)
    masked = jax.block_until_ready(masked)
    idx = jax.block_until_ready(idx)
    assert masked.shape == (B, 1, D), masked.shape
    assert idx.shape == (B,), idx.shape

    ref_idx = jnp.argmax(jnp.linalg.norm(x3, axis=2), axis=1).astype(jnp.int32)
    ref_masked = x3[jnp.arange(B), ref_idx][:, None, :]
    assert jnp.array_equal(idx, ref_idx)
    assert jnp.allclose(masked, ref_masked, atol=1e-6)
    assert jnp.all(jnp.isfinite(masked))

    # --- training path (target given) ---
    labels = jnp.array([1, 3, 5, 7], jnp.int32)
    tgt = jax.nn.one_hot(labels, C, dtype=jnp.float32)
    masked_t, idx_t = mask_cid(x, tgt)
    jax.block_until_ready(masked_t)
    assert jnp.array_equal(idx_t, labels)
    assert jnp.allclose(masked_t, x3[jnp.arange(B), labels][:, None, :], atol=1e-6)

    # --- native bf16 input (no wrapper cast; f32 only for the score accumulation) ---
    xb = x.astype(jnp.bfloat16)
    masked_b, idx_b = mask_cid(xb)
    jax.block_until_ready(masked_b)
    x3b = xb[..., 0]
    sb = jnp.sum(x3b.astype(jnp.float32) ** 2, axis=2)
    ref_idx_b = jnp.argmax(sb, axis=1).astype(jnp.int32)
    assert masked_b.dtype == jnp.bfloat16
    assert jnp.array_equal(idx_b, ref_idx_b)
    assert jnp.array_equal(masked_b[:, 0, :], x3b[jnp.arange(B), ref_idx_b])

    # --- batch-tiled path (grid over B, "parallel" semantics) ---
    Bb = 32
    xbig = jax.random.normal(kb, (Bb, C, D, 1), jnp.float32)
    masked_big, idx_big = mask_cid(xbig, batch_tile=8)
    jax.block_until_ready(masked_big)
    x3big = xbig[..., 0]
    ref_idx_big = jnp.argmax(jnp.linalg.norm(x3big, axis=2), axis=1).astype(jnp.int32)
    assert jnp.array_equal(idx_big, ref_idx_big)
    assert jnp.allclose(masked_big[:, 0, :], x3big[jnp.arange(Bb), ref_idx_big],
                        atol=1e-6)

    print("KERNEL_OK")
</pallas_src>

<mosaic_0001>
module attributes {stable_mosaic.version = 11 : i64} {
  func.func @_mask_cid_kernel(%arg0: memref<4x10x16xf32, #tpu.memory_space<vmem>>, %arg1: memref<4x16xf32, #tpu.memory_space<vmem>>, %arg2: memref<4x1xi32, #tpu.memory_space<vmem>>) attributes {dimension_semantics = [], scalar_prefetch = 0 : i64, scratch_operands = 0 : i64, tpu.core_type = #tpu.core_type<tc>} {
    %c0 = arith.constant 0 : index
    %c0_0 = arith.constant 0 : index
    %c0_1 = arith.constant 0 : index
    %0 = vector.load %arg0[%c0, %c0_0, %c0_1] : memref<4x10x16xf32, #tpu.memory_space<vmem>>, vector<4x10x16xf32>
    %1 = arith.mulf %0, %0 : vector<4x10x16xf32>
    %cst = arith.constant dense<0.000000e+00> : vector<4x10xf32>
    %2 = vector.multi_reduction <add>, %1, %cst [2] : vector<4x10x16xf32> to vector<4x10xf32>
    %cst_2 = arith.constant dense<0xFF800000> : vector<4xf32>
    %3 = vector.multi_reduction <maximumf>, %2, %cst_2 [1] : vector<4x10xf32> to vector<4xf32>
    %4 = vector.shape_cast %3 : vector<4xf32> to vector<4x1xf32>
    %5 = tpu.iota {dimensions = array<i32: 1>} : vector<4x10xi32>
    %6 = vector.broadcast %4 : vector<4x1xf32> to vector<4x10xf32>
    %7 = arith.cmpf oeq, %2, %6 : vector<4x10xf32>
    %c10_i32 = arith.constant 10 : i32
    %8 = vector.broadcast %c10_i32 : i32 to vector<4x10xi32>
    %9 = arith.select %7, %5, %8 : vector<4x10xi1>, vector<4x10xi32>
    %cst_3 = arith.constant dense<2147483647> : vector<4xi32>
    %10 = vector.multi_reduction <minsi>, %9, %cst_3 [1] : vector<4x10xi32> to vector<4xi32>
    %11 = vector.shape_cast %10 : vector<4xi32> to vector<4x1xi32>
    %12 = vector.broadcast %11 : vector<4x1xi32> to vector<4x10xi32>
    %13 = arith.cmpi eq, %5, %12 : vector<4x10xi32>
    %14 = arith.extui %13 : vector<4x10xi1> to vector<4x10xi32>
    %15 = arith.sitofp %14 : vector<4x10xi32> to vector<4x10xf32>
    %16 = vector.shape_cast %15 : vector<4x10xf32> to vector<4x10x1xf32>
    %17 = vector.broadcast %16 : vector<4x10x1xf32> to vector<4x10x16xf32>
    %18 = arith.mulf %0, %17 : vector<4x10x16xf32>
    %cst_4 = arith.constant dense<0.000000e+00> : vector<4x16xf32>
    %19 = vector.multi_reduction <add>, %18, %cst_4 [1] : vector<4x10x16xf32> to vector<4x16xf32>
    %c0_5 = arith.constant 0 : index
    %c0_6 = arith.constant 0 : index
    %20 = vector.load %arg1[%c0_5, %c0_6] : memref<4x16xf32, #tpu.memory_space<vmem>>, vector<4x16xf32>
    tpu.vector_store %arg1[%c0_5, %c0_6], %19 {strides = array<i32>} : memref<4x16xf32, #tpu.memory_space<vmem>>, vector<4x16xf32>,
    %c0_7 = arith.constant 0 : index
    %c0_8 = arith.constant 0 : index
    %21 = vector.load %arg2[%c0_7, %c0_8] : memref<4x1xi32, #tpu.memory_space<vmem>>, vector<4x1xi32>
    tpu.vector_store %arg2[%c0_7, %c0_8], %11 {strides = array<i32>} : memref<4x1xi32, #tpu.memory_space<vmem>>, vector<4x1xi32>,
    return
  }
}

</mosaic_0001>

<llo_original>
// kernel: tpu_custom_call.1
$region0: #{tpu_custom_call.1}
  #allocation0 [shape = 'u32[]', space=smem, size = 0x4, offset = 0x4, fixed_abs, tag = 'smem constant byte address 0x4 - core index']
  #allocation1 [shape = 'u32[144,128]{1,0:T(1,128)}', space=vmem, size = 0x12000, scoped, tag = 'internal scratch']
  %s0 = inlined_call_operand.vmem [shape: f32[4,10,16], index: 0, kind: input, shape index: {}]
  %s1 = inlined_call_operand.hbm [shape: f32[4,16], index: 1, kind: output, shape index: {0}]
  %s2 = inlined_call_operand.vmem [shape: s32[4,1], index: 2, kind: output, shape index: {1}]
  %3 = xla_tuple %s1, %s2
  %s4 = sld [smem:[#allocation0]]
  $region22: #{tpu_custom_call.1} parent=0
    _
  %s6 = ssub.s32 1, %s4
  %s7 = scalar_select 0, %s6, %s4
  $region1: #{tpu_custom_call.1} parent=0
    #allocation2 [shape = 'u8[2048]{0}', space=vmem, size = 0x800, scoped, tag = 'output window, operand 0, single buffered']
    #allocation3 [shape = 's32[1]{0}', space=sflag, size = 0x4, scoped, tag = 'scoped memory for tpu_custom_call.1']
    %8 = vsyncpa [#allocation3], 0
    // Predicated region
    $region2: #{tpu_custom_call.1} parent=1 // pred_check
      _
    $region3: #{tpu_custom_call.1} parent=1 // pred_check_branch
      %10 = sbr.rel (0) target = $region5
    $region4: #{tpu_custom_call.1} parent=1 // pred_region
      _
    $region5: #{tpu_custom_call.1} parent=1 // pred_fallthru
      _
    %v11 = vld [vmem:[%s0] sm:$0xff]
    %v12 = vld [vmem:[%s0 + $0x8] sm:$0x3]
    %v13 = vld [vmem:[%s0 + $0x10] sm:$0xff]
    %v14 = vld [vmem:[%s0 + $0x18] sm:$0x3]
    %v15 = vld [vmem:[%s0 + $0x20] sm:$0xff]
    %v16 = vld [vmem:[%s0 + $0x28] sm:$0x3]
    %v17 = vld [vmem:[%s0 + $0x30] sm:$0xff]
    %v18 = vld [vmem:[%s0 + $0x38] sm:$0x3]
    %v19 = vmul.f32 %v11, %v11
    %v20 = vmul.f32 %v12, %v12
    %v21 = vmul.f32 %v13, %v13
    %v22 = vmul.f32 %v14, %v14
    %v23 = vmul.f32 %v15, %v15
    %v24 = vmul.f32 %v16, %v16
    %v25 = vmul.f32 %v17, %v17
    %v26 = vmul.f32 %v18, %v18
    %vm27 = vcmask 130048
    %v28 = vsel %vm27, %v19, 0.0
    %29 = vadd.xlane.f32.xlu0 %v28
    %v30 = vpop.xlane.xlu0 %29
    %vm31 = vcmask 123904
    %v32 = vsel %vm31, %v20, 0.0
    %33 = vadd.xlane.f32.xlu0 %v32
    %v34 = vpop.xlane.xlu0 %33
    %v35 = vsel %vm27, %v21, 0.0
    %36 = vadd.xlane.f32.xlu0 %v35
    %v37 = vpop.xlane.xlu0 %36
    %v38 = vsel %vm31, %v22, 0.0
    %39 = vadd.xlane.f32.xlu0 %v38
    %v40 = vpop.xlane.xlu0 %39
    %v41 = vsel %vm27, %v23, 0.0
    %42 = vadd.xlane.f32.xlu0 %v41
    %v43 = vpop.xlane.xlu0 %42
    %v44 = vsel %vm31, %v24, 0.0
    %45 = vadd.xlane.f32.xlu0 %v44
    %v46 = vpop.xlane.xlu0 %45
    %v47 = vsel %vm27, %v25, 0.0
    %48 = vadd.xlane.f32.xlu0 %v47
    %v49 = vpop.xlane.xlu0 %48
    %v50 = vsel %vm31, %v26, 0.0
    %51 = vadd.xlane.f32.xlu0 %v50
    %v52 = vpop.xlane.xlu0 %51
    %v61 = vlaneseq
    %v62 = vand.u32 %v61, 127
    %v63 = vlaneseq
    %v64 = vshrl.u32 %v63, 7
    %v65 = vsub.s32 %v62, %v64
    %v66 = vrot.slane %v30, %v65
    %v67 = vadd.s32 %v62, 4294967288
    %v68 = vlaneseq
    %v69 = vshrl.u32 %v68, 7
    %v70 = vsub.s32 %v67, %v69
    %v71 = vrot.slane %v34, %v70
    %vm72 = vcmask 130112
    %v73 = vsel %vm72, %v71, %v66
    %v74 = vlaneseq
    %v75 = vshrl.u32 %v74, 7
    %v76 = vsub.s32 %v62, %v75
    %v77 = vrot.slane %v37, %v76
    %v78 = vlaneseq
    %v79 = vshrl.u32 %v78, 7
    %v80 = vsub.s32 %v67, %v79
    %v81 = vrot.slane %v40, %v80
    %v82 = vsel %vm72, %v81, %v77
    %v83 = vlaneseq
    %v84 = vshrl.u32 %v83, 7
    %v85 = vsub.s32 %v62, %v84
    %v86 = vrot.slane %v43, %v85
    %v87 = vlaneseq
    %v88 = vshrl.u32 %v87, 7
    %v89 = vsub.s32 %v67, %v88
    %v90 = vrot.slane %v46, %v89
    %v91 = vsel %vm72, %v90, %v86
    %v92 = vlaneseq
    %v93 = vshrl.u32 %v92, 7
    %v94 = vsub.s32 %v62, %v93
    %v95 = vrot.slane %v49, %v94
    %v96 = vlaneseq
    %v97 = vshrl.u32 %v96, 7
    %v98 = vsub.s32 %v67, %v97
    %v99 = vrot.slane %v52, %v98
    %v100 = vsel %vm72, %v99, %v95
    %vm101 = vcmask 1041409
    %v102 = vsel %vm101, %v82, %v73
    %vm103 = vcmask 1042434
    %v104 = vsel %vm103, %v91, %v102
    %vm105 = vcmask 1043459
    %v106 = vsel %vm105, %v100, %v104
    %vm108 = vcmask 76800
    %v109 = vsel %vm108, %v106, -inf
    %110 = vmax.xlane.f32.xlu0 %v109
    %v111 = vpop.xlane.xlu0 %110
    %v113 = vlaneseq
    %v114 = vshrl.u32 %v113, 7
    %v115 = vsub.s32 0, %v114
    %v116 = vrot.slane %v111, %v115
    %v117 = vlaneseq
    %v118 = vshrl.u32 %v117, 7
    %v119 = vsub.s32 1, %v118
    %v120 = vrot.slane %v111, %v119
    %v121 = vlaneseq
    %v122 = vshrl.u32 %v121, 7
    %v123 = vsub.s32 2, %v122
    %v124 = vrot.slane %v111, %v123
    %v125 = vlaneseq
    %v126 = vshrl.u32 %v125, 7
    %v127 = vsub.s32 3, %v126
    %v128 = vrot.slane %v111, %v127
    %vm133 = vcmp.eq.f32.partialorder %v30, %v116
    %vm134 = vcmp.eq.f32.partialorder %v34, %v116
    %vm135 = vcmp.eq.f32.partialorder %v37, %v120
    %vm136 = vcmp.eq.f32.partialorder %v40, %v120
    %vm137 = vcmp.eq.f32.partialorder %v43, %v124
    %vm138 = vcmp.eq.f32.partialorder %v46, %v124
    %vm139 = vcmp.eq.f32.partialorder %v49, %v128
    %vm140 = vcmp.eq.f32.partialorder %v52, %v128
    %142 = vbcast.lane.b32.xlu0 %v62, 256
    %v143 = vpop.permute.xlu0 %142
    %s145 = sor.u32 256, 8
    %146 = vbcast.lane.b32.xlu0 %v62, %s145
    %v147 = vpop.permute.xlu0 %146
    %v148 = vsel %vm133, %v143, 10
    %v149 = vsel %vm134, %v147, 10
    %v150 = vsel %vm135, %v143, 10
    %v151 = vsel %vm136, %v147, 10
    %v152 = vsel %vm137, %v143, 10
    %v153 = vsel %vm138, %v147, 10
    %v154 = vsel %vm139, %v143, 10
    %v155 = vsel %vm140, %v147, 10
    %156 = vset.pattern.permute.xlu0 0
    %157 = vperm.xlu0 %156, %v148
    %v158 = vpop.permute.xlu0 %157
    %159 = vset.pattern.permute.xlu0 0
    %160 = vperm.xlu0 %159, %v149
    %v161 = vpop.permute.xlu0 %160
    %162 = vset.pattern.permute.xlu0 0
    %163 = vperm.xlu0 %162, %v150
    %v164 = vpop.permute.xlu0 %163
    %165 = vset.pattern.permute.xlu0 0
    %166 = vperm.xlu0 %165, %v151
    %v167 = vpop.permute.xlu0 %166
    %168 = vset.pattern.permute.xlu0 0
    %169 = vperm.xlu0 %168, %v152
    %v170 = vpop.permute.xlu0 %169
    %171 = vset.pattern.permute.xlu0 0
    %172 = vperm.xlu0 %171, %v153
    %v173 = vpop.permute.xlu0 %172
    %174 = vset.pattern.permute.xlu0 0
    %175 = vperm.xlu0 %174, %v154
    %v176 = vpop.permute.xlu0 %175
    %177 = vset.pattern.permute.xlu0 0
    %178 = vperm.xlu0 %177, %v155
    %v179 = vpop.permute.xlu0 %178
    %v180 = vlaneseq
    %v181 = vshrl.u32 %v180, 7
    %v182 = vsub.s32 %v62, %v181
    %v183 = vrot.slane %v158, %v182
    %v184 = vlaneseq
    %v185 = vshrl.u32 %v184, 7
    %v186 = vsub.s32 %v67, %v185
    %v187 = vrot.slane %v161, %v186
    %v188 = vsel %vm72, %v187, %v183
    %v189 = vlaneseq
    %v190 = vshrl.u32 %v189, 7
    %v191 = vsub.s32 %v62, %v190
    %v192 = vrot.slane %v164, %v191
    %v193 = vlaneseq
    %v194 = vshrl.u32 %v193, 7
    %v195 = vsub.s32 %v67, %v194
    %v196 = vrot.slane %v167, %v195
    %v197 = vsel %vm72, %v196, %v192
    %v198 = vlaneseq
    %v199 = vshrl.u32 %v198, 7
    %v200 = vsub.s32 %v62, %v199
    %v201 = vrot.slane %v170, %v200
    %v202 = vlaneseq
    %v203 = vshrl.u32 %v202, 7
    %v204 = vsub.s32 %v67, %v203
    %v205 = vrot.slane %v173, %v204
    %v206 = vsel %vm72, %v205, %v201
    %v207 = vlaneseq
    %v208 = vshrl.u32 %v207, 7
    %v209 = vsub.s32 %v62, %v208
    %v210 = vrot.slane %v176, %v209
    %v211 = vlaneseq
    %v212 = vshrl.u32 %v211, 7
    %v213 = vsub.s32 %v67, %v212
    %v214 = vrot.slane %v179, %v213
    %v215 = vsel %vm72, %v214, %v210
    %v216 = vsel %vm101, %v197, %v188
    %v217 = vsel %vm103, %v206, %v216
    %v218 = vsel %vm105, %v215, %v217
    %v219 = vsel %vm108, %v218, 2147483647
    %v220 = vand.u32 %v219, 65535
    %v221 = vshra.s32 %v219, 16
    %v222 = vcvt.s32.f32 %v220
    %v223 = vcvt.s32.f32 %v221
    %224 = vmin.xlane.f32.xlu0 %v223
    %v225 = vpop.xlane.xlu0 %224
    %vm226 = vcmp.eq.f32.partialorder %v223, %v225
    %v227 = vsel %vm226, %v222, inf
    %228 = vmin.xlane.f32.xlu0 %v227
    %v229 = vpop.xlane.xlu0 %228
    %v230 = vcvt.f32.s32 %v229
    %v231 = vcvt.f32.s32 %v225
    %v232 = vshll.u32 %v231, 16
    %v233 = vadd.s32 %v232, %v230
    %vm234 = vcmp.eq.s32.totalorder %v62, %v233
    %v235 = vsel %vm234, 1, 0
    %v236 = vcvt.s32.f32 %v235
    %v237 = vlaneseq
    %v238 = vshrl.u32 %v237, 7
    %v239 = vsub.s32 0, %v238
    %v240 = vrot.slane %v236, %v239
    %242 = vbcast.lane.b32.xlu0 %v240, 256
    %v243 = vpop.permute.xlu0 %242
    %s245 = sor.u32 256, 8
    %246 = vbcast.lane.b32.xlu0 %v240, %s245
    %v247 = vpop.permute.xlu0 %246
    %v248 = vlaneseq
    %v249 = vshrl.u32 %v248, 7
    %v250 = vsub.s32 1, %v249
    %v251 = vrot.slane %v236, %v250
    %253 = vbcast.lane.b32.xlu0 %v251, 256
    %v254 = vpop.permute.xlu0 %253
    %s256 = sor.u32 256, 8
    %257 = vbcast.lane.b32.xlu0 %v251, %s256
    %v258 = vpop.permute.xlu0 %257
    %v259 = vlaneseq
    %v260 = vshrl.u32 %v259, 7
    %v261 = vsub.s32 2, %v260
    %v262 = vrot.slane %v236, %v261
    %264 = vbcast.lane.b32.xlu0 %v262, 256
    %v265 = vpop.permute.xlu0 %264
    %s267 = sor.u32 256, 8
    %268 = vbcast.lane.b32.xlu0 %v262, %s267
    %v269 = vpop.permute.xlu0 %268
    %v270 = vlaneseq
    %v271 = vshrl.u32 %v270, 7
    %v272 = vsub.s32 3, %v271
    %v273 = vrot.slane %v236, %v272
    %275 = vbcast.lane.b32.xlu0 %v273, 256
    %v276 = vpop.permute.xlu0 %275
    %s278 = sor.u32 256, 8
    %279 = vbcast.lane.b32.xlu0 %v273, %s278
    %v280 = vpop.permute.xlu0 %279
    %v281 = vmul.f32 %v11, %v243
    %v282 = vmul.f32 %v12, %v247
    %v283 = vmul.f32 %v13, %v254
    %v284 = vmul.f32 %v14, %v258
    %v285 = vmul.f32 %v15, %v265
    %v286 = vmul.f32 %v16, %v269
    %v287 = vmul.f32 %v17, %v276
    %v288 = vmul.f32 %v18, %v280
    %v289 = vsel %vm27, %v281, 0.0
    %v290 = vsel %vm31, %v282, 0.0
    %v291 = vadd.f32 %v289, %v290
    %v292 = vrot.slane %v291, 4
    %v293 = vadd.f32 %v291, %v292
    %v294 = vrot.slane %v293, 2
    %v295 = vadd.f32 %v293, %v294
    %v296 = vrot.slane %v295, 1
    %v297 = vadd.f32 %v295, %v296
    %v298 = vsel %vm27, %v283, 0.0
    %v299 = vsel %vm31, %v284, 0.0
    %v300 = vadd.f32 %v298, %v299
    %v301 = vrot.slane %v300, 4
    %v302 = vadd.f32 %v300, %v301
    %v303 = vrot.slane %v302, 2
    %v304 = vadd.f32 %v302, %v303
    %v305 = vrot.slane %v304, 1
    %v306 = vadd.f32 %v304, %v305
    %v307 = vsel %vm27, %v285, 0.0
    %v308 = vsel %vm31, %v286, 0.0
    %v309 = vadd.f32 %v307, %v308
    %v310 = vrot.slane %v309, 4
    %v311 = vadd.f32 %v309, %v310
    %v312 = vrot.slane %v311, 2
    %v313 = vadd.f32 %v311, %v312
    %v314 = vrot.slane %v313, 1
    %v315 = vadd.f32 %v313, %v314
    %v316 = vsel %vm27, %v287, 0.0
    %v317 = vsel %vm31, %v288, 0.0
    %v318 = vadd.f32 %v316, %v317
    %v319 = vrot.slane %v318, 4
    %v320 = vadd.f32 %v318, %v319
    %v321 = vrot.slane %v320, 2
    %v322 = vadd.f32 %v320, %v321
    %v323 = vrot.slane %v322, 1
    %v324 = vadd.f32 %v322, %v323
    %v329 = vsel %vm101, %v306, %v297
    %v330 = vsel %vm103, %v315, %v329
    %v331 = vsel %vm105, %v324, %v330
    %vm333 = vcmask 125952
    %334 = vst.msk [vmem:[#allocation2] sm:$0xf] %vm333, %v331
    %vm335 = vcmask 3072
    %336 = vst.msk [vmem:[%s2] sm:$0xf] %vm335, %v233
    // Predicated region
    $region6: #{tpu_custom_call.1} parent=1 // pred_check
      _
    $region7: #{tpu_custom_call.1} parent=1 // pred_check_branch
      %338 = sbr.rel (0) target = $region9
    $region8: #{tpu_custom_call.1} parent=1 // pred_region
      %s340 = ssub.s32 64, 64
      %341 = vsyncadd [#allocation3], %s340
      %s343 = sshll.u32 [#allocation2], 4
      %s344 = int_to_ptr.vmem [resolvable:$true] %s343
      %346 = dma.vmem_to_hbm [thread:$0]  %s344, 64, %s1, [#allocation3]
    $region9: #{tpu_custom_call.1} parent=1 // pred_fallthru
      _
    // Predicated region
    $region10: #{tpu_custom_call.1} parent=1 // pred_check
      _
    $region11: #{tpu_custom_call.1} parent=1 // pred_check_branch
      %348 = sbr.rel (0) target = $region13
    $region12: #{tpu_custom_call.1} parent=1 // pred_region
      _
    $region13: #{tpu_custom_call.1} parent=1 // pred_fallthru
      _
    // Predicated region
    $region14: #{tpu_custom_call.1} parent=1 // pred_check
      _
    $region15: #{tpu_custom_call.1} parent=1 // pred_check_branch
      %350 = sbr.rel (0) target = $region17
    $region16: #{tpu_custom_call.1} parent=1 // pred_region
      %351 = dma.done [#allocation3], 64
    $region17: #{tpu_custom_call.1} parent=1 // pred_fallthru
      _
    // Predicated region
    $region18: #{tpu_custom_call.1} parent=1 // pred_check
      _
    $region19: #{tpu_custom_call.1} parent=1 // pred_check_branch
      %353 = sbr.rel (0) target = $region21
    $region20: #{tpu_custom_call.1} parent=1 // pred_region
      _
    $region21: #{tpu_custom_call.1} parent=1 // pred_fallthru
      _
    %354 = vsyncpa [#allocation3], 1

</llo_original>
